<compile_context>
chip_gen: v5e
topology: v5e:2x2
jax: 0.10.0
libtpu: 0.0.40
codegen_flags: <defaults>
</compile_context>

<pallas_src>
import functools

import jax
import jax.numpy as jnp
from jax import lax
from jax.experimental import pallas as pl
from jax.experimental.pallas import tpu as pltpu


def tied_ae_kernel(x_ref, w_ref, rec_ref, enc_ref):
    """One batch tile of the tied-autoencoder forward.

    x_ref:   (TB, D)  input tile
    w_ref:   (E,  D)  tied encoder weight (single-buffered, VMEM-resident)
    rec_ref: (TB, D)  reconstructed output tile
    enc_ref: (TB, E)  encoded (post-ReLU) output tile
    """
    x = x_ref[...]
    w = w_ref[...]

    # encoded = relu(x @ W.T). Contracting (x dim 1, w dim 1) is exactly the
    # dimension_numbers pl.dot(x, w, trans_b=True) produces; Mosaic feeds the
    # transposed RHS to the MXU weight load directly (no per-step XLU
    # transpose / temporary VMEM copy). Accumulate in f32 on the MXU.
    enc_f32 = lax.dot_general(
        x, w,
        dimension_numbers=(((1,), (1,)), ((), ())),
        preferred_element_type=jnp.float32,
    )

    # Single cast of the activation to the weight dtype; the same value is
    # stored and reused as the LHS of the second matmul (for bf16 weights this
    # keeps both matmuls on the fast MXU path with only one (TB, E) VPU cast).
    enc_lp = jnp.maximum(enc_f32, 0.0).astype(w_ref.dtype)
    enc_ref[...] = enc_lp.astype(enc_ref.dtype)  # no-op cast when dtypes match

    # reconstructed = encoded @ W (tied weights), f32 accumulation.
    rec_f32 = lax.dot_general(
        enc_lp, w,
        dimension_numbers=(((1,), (0,)), ((), ())),
        preferred_element_type=jnp.float32,
    )
    rec_ref[...] = rec_f32.astype(rec_ref.dtype)


def _sublane_multiple(dtype) -> int:
    """Sublane packing multiple for a dtype (8 f32, 16 bf16, 32 int8/fp8)."""
    return max(8, 32 // jnp.dtype(dtype).itemsize)


def _round_up(a: int, m: int) -> int:
    return ((a + m - 1) // m) * m


def _pick_batch_tile(batch: int, block_b: int, sublane: int) -> int:
    """Batch tile: <= block_b rows, sublane-aligned, >= 2 tiles when possible
    so v7x's two TensorCores both get work (neutral on v5e/v6e)."""
    if batch <= sublane:
        return batch  # single full-batch block; full-dim blocks need no alignment
    target_tiles = max(2, pl.cdiv(batch, max(block_b, sublane)))
    tb = _round_up(pl.cdiv(batch, target_tiles), sublane)
    return max(sublane, min(tb, _round_up(batch, sublane)))


def _vmem_budget_bytes(tb, D, E, x_dtype, w_dtype, out_dtype) -> int:
    """Working-set estimate: single-buffered W, double-buffered x/rec/enc
    tiles, plus the f32 / low-precision intermediates."""
    xs = jnp.dtype(x_dtype).itemsize
    ws = jnp.dtype(w_dtype).itemsize
    os_ = jnp.dtype(out_dtype).itemsize
    w_bytes = E * D * ws                                   # Buffered(1)
    io_bytes = 2 * (tb * D * xs + tb * D * os_ + tb * E * os_)
    interm = tb * E * 4 + tb * D * 4 + tb * E * ws
    est = w_bytes + io_bytes + interm
    # 25% + 2 MiB headroom, floor 16 MiB, clamp to 64 MiB (safe on v7x too).
    return int(min(64 * 1024 * 1024, max(est * 5 // 4 + (2 << 20), 16 << 20)))


@functools.partial(jax.jit, static_argnames=("block_b", "compute_dtype"))
def tied_autoencoder_forward(x, w, *, block_b=256, compute_dtype=None):
    """x: (B, D), w: (E, D) -> (reconstructed (B, D), encoded (B, E)).

    compute_dtype: optionally cast x and w (e.g. to bf16) for the MXU-native
    fast path; accumulation is always f32.
    """
    if compute_dtype is not None:
        x = x.astype(compute_dtype)
        w = w.astype(compute_dtype)

    B, D = x.shape
    E, D2 = w.shape
    assert D == D2, "weight/input dim mismatch"
    # Note: D and E that are multiples of 128 give lane-dense unmasked stores;
    # other sizes still work (full-dim blocks) but fall back to masked vst.

    sublane = _sublane_multiple(x.dtype)
    tb = _pick_batch_tile(B, block_b, sublane)
    grid = (pl.cdiv(B, tb),)

    out_dtype = x.dtype
    rec_shape = jax.ShapeDtypeStruct((B, D), out_dtype)
    enc_shape = jax.ShapeDtypeStruct((B, E), out_dtype)

    vmem_limit = _vmem_budget_bytes(tb, D, E, x.dtype, w.dtype, out_dtype)

    # TODO(synk): for weights too large to keep resident single-buffered
    # (>~24-32 MiB on v7x), add a D-reduction grid axis (W tiled (E, tk),
    # f32 accumulator scratch, axis marked "arbitrary" and placed last).
    # TODO(synk): if E << D and the kernel becomes HBM-bound on the x/rec
    # streams, bump the x spec to pipeline_mode=pl.Buffered(3).
    return pl.pallas_call(
        tied_ae_kernel,
        out_shape=(rec_shape, enc_shape),
        grid=grid,
        in_specs=[
            # x tiles march over the batch (double-buffered by default).
            pl.BlockSpec((tb, D), lambda i: (i, 0)),
            # Tied weight: constant block index -> DMA'd once; single-buffer it
            # so Pallas does not allocate a useless second (E, D) VMEM buffer.
            pl.BlockSpec((E, D), lambda i: (0, 0), pipeline_mode=pl.Buffered(1)),
        ],
        out_specs=[
            pl.BlockSpec((tb, D), lambda i: (i, 0)),
            pl.BlockSpec((tb, E), lambda i: (i, 0)),
        ],
        compiler_params=pltpu.CompilerParams(
            # Batch tiles are independent -> shard across TCs on v7x megacore.
            dimension_semantics=("parallel",),
            vmem_limit_bytes=vmem_limit,
        ),
    )(x, w)


def _reference(x, w):
    enc = jnp.maximum(
        jnp.dot(x, w.T, preferred_element_type=jnp.float32), 0.0)
    rec = jnp.dot(enc.astype(w.dtype), w, preferred_element_type=jnp.float32)
    return rec.astype(x.dtype), enc.astype(x.dtype)


if __name__ == "__main__":
    # Shapes consistent with the module: batch=8, input_dim=256, encoding_dim=128
    batch, input_dim, encoding_dim = 8, 256, 128

    key = jax.random.PRNGKey(0)
    kx, kw = jax.random.split(key)

    x = jax.random.normal(kx, (batch, input_dim), dtype=jnp.float32)
    # Deterministic init mimicking nn.Linear's uniform(-1/sqrt(fan_in), 1/sqrt(fan_in))
    bound = 1.0 / (input_dim ** 0.5)
    w = jax.random.uniform(
        kw, (encoding_dim, input_dim), dtype=jnp.float32,
        minval=-bound, maxval=bound,
    )

    # 1) f32, single-tile path.
    reconstructed, encoded = tied_autoencoder_forward(x, w)
    jax.block_until_ready((reconstructed, encoded))
    rec_ref, enc_ref = _reference(x, w)
    assert reconstructed.shape == (batch, input_dim)
    assert encoded.shape == (batch, encoding_dim)
    assert jnp.allclose(encoded, enc_ref, atol=1e-4, rtol=1e-4)
    assert jnp.allclose(reconstructed, rec_ref, atol=1e-4, rtol=1e-4)

    # 2) f32, multi-tile batch path (grid > 1, resident single-buffered weight).
    kx2, _ = jax.random.split(kx)
    x2 = jax.random.normal(kx2, (24, input_dim), dtype=jnp.float32)
    rec2, enc2 = tied_autoencoder_forward(x2, w, block_b=8)
    jax.block_until_ready((rec2, enc2))
    rec2_ref, enc2_ref = _reference(x2, w)
    assert jnp.allclose(enc2, enc2_ref, atol=1e-4, rtol=1e-4)
    assert jnp.allclose(rec2, rec2_ref, atol=1e-4, rtol=1e-4)

    # 3) bf16 fast path (MXU-native operands, f32 accumulation).
    rec3, enc3 = tied_autoencoder_forward(x2, w, compute_dtype=jnp.bfloat16)
    jax.block_until_ready((rec3, enc3))
    rec3_ref, enc3_ref = _reference(
        x2.astype(jnp.bfloat16), w.astype(jnp.bfloat16))
    assert jnp.allclose(enc3.astype(jnp.float32), enc3_ref.astype(jnp.float32),
                        atol=2e-2, rtol=2e-2)
    assert jnp.allclose(rec3.astype(jnp.float32), rec3_ref.astype(jnp.float32),
                        atol=2e-2, rtol=2e-2)

    print("KERNEL_OK")
</pallas_src>

<mosaic_0001>
module attributes {stable_mosaic.version = 11 : i64} {
  func.func @tied_ae_kernel(%arg0: i32, %arg1: memref<8x256xf32, #tpu.memory_space<vmem>>, %arg2: memref<128x256xf32, #tpu.memory_space<vmem>>, %arg3: memref<8x256xf32, #tpu.memory_space<vmem>>, %arg4: memref<8x128xf32, #tpu.memory_space<vmem>>) attributes {dimension_semantics = [#tpu.dimension_semantics<parallel>], iteration_bounds = array<i64: 1>, scalar_prefetch = 0 : i64, scratch_operands = 0 : i64, tpu.core_type = #tpu.core_type<tc>, window_params = [{transform_indices = @transform_0, window_bounds = array<i64: 8, 256>}, {pipeline_mode = #tpu.pipeline_mode<synchronous>, transform_indices = @transform_1, window_bounds = array<i64: 128, 256>}, {transform_indices = @transform_2, window_bounds = array<i64: 8, 256>}, {transform_indices = @transform_3, window_bounds = array<i64: 8, 128>}]} {
    %c0 = arith.constant 0 : index
    %c0_0 = arith.constant 0 : index
    %0 = vector.load %arg1[%c0, %c0_0] : memref<8x256xf32, #tpu.memory_space<vmem>>, vector<8x256xf32>
    %c0_1 = arith.constant 0 : index
    %c0_2 = arith.constant 0 : index
    %1 = vector.load %arg2[%c0_1, %c0_2] : memref<128x256xf32, #tpu.memory_space<vmem>>, vector<128x256xf32>
    %cst = arith.constant dense<0.000000e+00> : vector<8x128xf32>
    %2 = tpu.matmul %0, %1, %cst {dimension_numbers = #tpu.dot_dimension_numbers<[1], [1], [0], [0], [0, 0, 1, 0], [], []>} : vector<8x256xf32>, vector<128x256xf32>, vector<8x128xf32> -> vector<8x128xf32>
    %cst_3 = arith.constant 0.000000e+00 : f32
    %3 = vector.broadcast %cst_3 : f32 to vector<8x128xf32>
    %4 = arith.maximumf %2, %3 : vector<8x128xf32>
    %c0_4 = arith.constant 0 : index
    %c0_5 = arith.constant 0 : index
    %5 = vector.load %arg4[%c0_4, %c0_5] : memref<8x128xf32, #tpu.memory_space<vmem>>, vector<8x128xf32>
    tpu.vector_store %arg4[%c0_4, %c0_5], %4 {strides = array<i32>} : memref<8x128xf32, #tpu.memory_space<vmem>>, vector<8x128xf32>,
    %cst_6 = arith.constant dense<0.000000e+00> : vector<8x256xf32>
    %6 = tpu.matmul %4, %1, %cst_6 {dimension_numbers = #tpu.dot_dimension_numbers<[1], [0], [0], [1], [0, 0, 1, 1], [], []>} : vector<8x128xf32>, vector<128x256xf32>, vector<8x256xf32> -> vector<8x256xf32>
    %c0_7 = arith.constant 0 : index
    %c0_8 = arith.constant 0 : index
    %7 = vector.load %arg3[%c0_7, %c0_8] : memref<8x256xf32, #tpu.memory_space<vmem>>, vector<8x256xf32>
    tpu.vector_store %arg3[%c0_7, %c0_8], %6 {strides = array<i32>} : memref<8x256xf32, #tpu.memory_space<vmem>>, vector<8x256xf32>,
    return
  }
  func.func @transform_0(%arg0: i32) -> (i32, i32) {
    %c0_i32 = arith.constant 0 : i32
    %c0_i32_0 = arith.constant 0 : i32
    return %arg0, %c0_i32 : i32, i32
  }
  func.func @transform_1(%arg0: i32) -> (i32, i32) {
    %c0_i32 = arith.constant 0 : i32
    %c0_i32_0 = arith.constant 0 : i32
    %c0_i32_1 = arith.constant 0 : i32
    return %c0_i32, %c0_i32_0 : i32, i32
  }
  func.func @transform_2(%arg0: i32) -> (i32, i32) {
    %c0_i32 = arith.constant 0 : i32
    %c0_i32_0 = arith.constant 0 : i32
    return %arg0, %c0_i32 : i32, i32
  }
  func.func @transform_3(%arg0: i32) -> (i32, i32) {
    %c0_i32 = arith.constant 0 : i32
    %c0_i32_0 = arith.constant 0 : i32
    return %arg0, %c0_i32 : i32, i32
  }
}

</mosaic_0001>

<llo_original>
// kernel: tied_autoencoder_forward.1
$region0: #{tied_autoencoder_forward.1}
  #allocation0 [shape = 'u32[]', space=smem, size = 0x4, offset = 0x4, fixed_abs, tag = 'smem constant byte address 0x4 - core index']
  #allocation1 [shape = 'u32[72,128]{1,0:T(1,128)}', space=vmem, size = 0x9000, scoped, tag = 'internal scratch']
  %s0 = inlined_call_operand.hbm [shape: f32[8,256], index: 0, kind: input, shape index: {}]
  %s1 = inlined_call_operand.hbm [shape: f32[128,256], index: 1, kind: input, shape index: {}]
  %s2 = inlined_call_operand.hbm [shape: f32[8,256], index: 2, kind: output, shape index: {0}]
  %s3 = inlined_call_operand.hbm [shape: f32[8,128], index: 3, kind: output, shape index: {1}]
  %4 = xla_tuple %s2, %s3
  %s5 = sld [smem:[#allocation0]]
  $region34: #{tied_autoencoder_forward.1} parent=0
    _
  %s7 = ssub.s32 1, %s5
  %s8 = scalar_select 0, %s7, %s5
  $region1: #{tied_autoencoder_forward.1} parent=0
    #allocation2 [shape = 'u8[8192]{0}', space=vmem, size = 0x2000, scoped, tag = 'input window, operand 0, single buffered']
    #allocation3 [shape = 's32[1]{0}', space=sflag, size = 0x4, scoped, tag = 'scoped memory for tied_autoencoder_forward.1']
    #allocation4 [shape = 's32[1]{0}', space=sflag, size = 0x4, scoped, tag = 'scoped memory for tied_autoencoder_forward.1']
    #allocation5 [shape = 'u8[131072]{0}', space=vmem, size = 0x20000, scoped, tag = 'input window, operand 1, single buffered']
    #allocation6 [shape = 's32[1]{0}', space=sflag, size = 0x4, scoped, tag = 'scoped memory for tied_autoencoder_forward.1']
    #allocation7 [shape = 'u8[8192]{0}', space=vmem, size = 0x2000, scoped, tag = 'output window, operand 0, single buffered']
    #allocation8 [shape = 'u8[4096]{0}', space=vmem, size = 0x1000, scoped, tag = 'output window, operand 1, single buffered']
    #allocation9 [shape = 's32[1]{0}', space=sflag, size = 0x4, scoped, tag = 'scoped memory for tied_autoencoder_forward.1']
    %9 = vsyncpa [#allocation3], 0
    %10 = vsyncpa [#allocation6], 0
    %11 = vsyncpa [#allocation4], 0
    %12 = vsyncpa [#allocation9], 0
    // Predicated region
    $region2: #{tied_autoencoder_forward.1} parent=1 // pred_check
      _
    $region3: #{tied_autoencoder_forward.1} parent=1 // pred_check_branch
      %14 = sbr.rel (0) target = $region5
    $region4: #{tied_autoencoder_forward.1} parent=1 // pred_region
      %16 = vsyncadd [#allocation3], 0
      %s18 = sshll.u32 %s0, 4
      %s19 = int_to_ptr.hbm [resolvable:$true] %s18
      %s20 = sshll.u32 [#allocation2], 4
      %s21 = int_to_ptr.vmem [resolvable:$true] %s20
      %23 = dma.hbm_to_vmem [thread:$0]  %s19, 256, %s21, [#allocation3]
    $region5: #{tied_autoencoder_forward.1} parent=1 // pred_fallthru
      _
    // Predicated region
    $region6: #{tied_autoencoder_forward.1} parent=1 // pred_check
      _
    $region7: #{tied_autoencoder_forward.1} parent=1 // pred_check_branch
      %25 = sbr.rel (0) target = $region9
    $region8: #{tied_autoencoder_forward.1} parent=1 // pred_region
      %27 = vsyncadd [#allocation6], 0
      %s28 = sshll.u32 %s1, 4
      %s29 = int_to_ptr.hbm [resolvable:$true] %s28
      %s30 = sshll.u32 [#allocation5], 4
      %s31 = int_to_ptr.vmem [resolvable:$true] %s30
      %36 = dma.hbm_to_vmem [thread:$0]  %s29, 4096, %s31, [#allocation6], 256, 256, 16
    $region9: #{tied_autoencoder_forward.1} parent=1 // pred_fallthru
      _
    // Predicated region
    $region10: #{tied_autoencoder_forward.1} parent=1 // pred_check
      _
    $region11: #{tied_autoencoder_forward.1} parent=1 // pred_check_branch
      %38 = sbr.rel (0) target = $region13
    $region12: #{tied_autoencoder_forward.1} parent=1 // pred_region
      %40 = dma.done [#allocation3], 256
    $region13: #{tied_autoencoder_forward.1} parent=1 // pred_fallthru
      _
    // Predicated region
    $region14: #{tied_autoencoder_forward.1} parent=1 // pred_check
      _
    $region15: #{tied_autoencoder_forward.1} parent=1 // pred_check_branch
      %42 = sbr.rel (0) target = $region17
    $region16: #{tied_autoencoder_forward.1} parent=1 // pred_region
      %44 = dma.done [#allocation6], 4096
    $region17: #{tied_autoencoder_forward.1} parent=1 // pred_fallthru
      _
    %v45 = vld [vmem:[#allocation2] sm:$0xff]
    %v46 = vld [vmem:[#allocation2 + $0x8] sm:$0xff]
    %v47 = vld [vmem:[#allocation5] sm:$0xff]
    %v48 = vld [vmem:[#allocation5 + $0x8] sm:$0xff]
    %v49 = vld [vmem:[#allocation5 + $0x10] sm:$0xff]
    %v50 = vld [vmem:[#allocation5 + $0x18] sm:$0xff]
    %v51 = vld [vmem:[#allocation5 + $0x20] sm:$0xff]
    %v52 = vld [vmem:[#allocation5 + $0x28] sm:$0xff]
    %v53 = vld [vmem:[#allocation5 + $0x30] sm:$0xff]
    %v54 = vld [vmem:[#allocation5 + $0x38] sm:$0xff]
    %v55 = vld [vmem:[#allocation5 + $0x40] sm:$0xff]
    %v56 = vld [vmem:[#allocation5 + $0x48] sm:$0xff]
    %v57 = vld [vmem:[#allocation5 + $0x50] sm:$0xff]
    %v58 = vld [vmem:[#allocation5 + $0x58] sm:$0xff]
    %v59 = vld [vmem:[#allocation5 + $0x60] sm:$0xff]
    %v60 = vld [vmem:[#allocation5 + $0x68] sm:$0xff]
    %v61 = vld [vmem:[#allocation5 + $0x70] sm:$0xff]
    %v62 = vld [vmem:[#allocation5 + $0x78] sm:$0xff]
    %v63 = vld [vmem:[#allocation5 + $0x80] sm:$0xff]
    %v64 = vld [vmem:[#allocation5 + $0x88] sm:$0xff]
    %v65 = vld [vmem:[#allocation5 + $0x90] sm:$0xff]
    %v66 = vld [vmem:[#allocation5 + $0x98] sm:$0xff]
    %v67 = vld [vmem:[#allocation5 + $0xa0] sm:$0xff]
    %v68 = vld [vmem:[#allocation5 + $0xa8] sm:$0xff]
    %v69 = vld [vmem:[#allocation5 + $0xb0] sm:$0xff]
    %v70 = vld [vmem:[#allocation5 + $0xb8] sm:$0xff]
    %v71 = vld [vmem:[#allocation5 + $0xc0] sm:$0xff]
    %v72 = vld [vmem:[#allocation5 + $0xc8] sm:$0xff]
    %v73 = vld [vmem:[#allocation5 + $0xd0] sm:$0xff]
    %v74 = vld [vmem:[#allocation5 + $0xd8] sm:$0xff]
    %v75 = vld [vmem:[#allocation5 + $0xe0] sm:$0xff]
    %v76 = vld [vmem:[#allocation5 + $0xe8] sm:$0xff]
    %v77 = vld [vmem:[#allocation5 + $0xf0] sm:$0xff]
    %v78 = vld [vmem:[#allocation5 + $0xf8] sm:$0xff]
    %79 = vmatpush.xpose.msra.mxu0 %v77
    %80 = vmatpush.xpose.msra.mxu0 %v75
    %81 = vmatpush.xpose.msra.mxu0 %v73
    %82 = vmatpush.xpose.msra.mxu0 %v71
    %83 = vmatpush.xpose.msra.mxu0 %v69
    %84 = vmatpush.xpose.msra.mxu0 %v67
    %85 = vmatpush.xpose.msra.mxu0 %v65
    %86 = vmatpush.xpose.msra.mxu0 %v63
    %87 = vmatpush.xpose.msra.mxu0 %v61
    %88 = vmatpush.xpose.msra.mxu0 %v59
    %89 = vmatpush.xpose.msra.mxu0 %v57
    %90 = vmatpush.xpose.msra.mxu0 %v55
    %91 = vmatpush.xpose.msra.mxu0 %v53
    %92 = vmatpush.xpose.msra.mxu0 %v51
    %93 = vmatpush.xpose.msra.mxu0 %v49
    %94 = vmatpush.xpose.msra.mxu0 %v47
    %95 = vmatmul.f32.gmra.mxu0 %v45
    %v96 = vpop.f32.mrf.mxu0
    %v97 = vadd.f32 0.0, %v96
    %98 = vdwg.mxu0
    %99 = vmatpush.xpose.msra.mxu0 %v78
    %100 = vmatpush.xpose.msra.mxu0 %v76
    %101 = vmatpush.xpose.msra.mxu0 %v74
    %102 = vmatpush.xpose.msra.mxu0 %v72
    %103 = vmatpush.xpose.msra.mxu0 %v70
    %104 = vmatpush.xpose.msra.mxu0 %v68
    %105 = vmatpush.xpose.msra.mxu0 %v66
    %106 = vmatpush.xpose.msra.mxu0 %v64
    %107 = vmatpush.xpose.msra.mxu0 %v62
    %108 = vmatpush.xpose.msra.mxu0 %v60
    %109 = vmatpush.xpose.msra.mxu0 %v58
    %110 = vmatpush.xpose.msra.mxu0 %v56
    %111 = vmatpush.xpose.msra.mxu0 %v54
    %112 = vmatpush.xpose.msra.mxu0 %v52
    %113 = vmatpush.xpose.msra.mxu0 %v50
    %114 = vmatpush.xpose.msra.mxu0 %v48
    %115 = vmatmul.f32.gmra.mxu0 %v46
    %v116 = vpop.f32.mrf.mxu0
    %v117 = vadd.f32 %v97, %v116
    %118 = vdwg.mxu0
    %v119 = vmax.f32 %v117, 0.0
    %120 = vst [vmem:[#allocation8] sm:$0xff] %v119
    %121 = vmatpush.msra.mxu0 %v77
    %122 = vmatpush.msra.mxu0 %v75
    %123 = vmatpush.msra.mxu0 %v73
    %124 = vmatpush.msra.mxu0 %v71
    %125 = vmatpush.msra.mxu0 %v69
    %126 = vmatpush.msra.mxu0 %v67
    %127 = vmatpush.msra.mxu0 %v65
    %128 = vmatpush.msra.mxu0 %v63
    %129 = vmatpush.msra.mxu0 %v61
    %130 = vmatpush.msra.mxu0 %v59
    %131 = vmatpush.msra.mxu0 %v57
    %132 = vmatpush.msra.mxu0 %v55
    %133 = vmatpush.msra.mxu0 %v53
    %134 = vmatpush.msra.mxu0 %v51
    %135 = vmatpush.msra.mxu0 %v49
    %136 = vmatpush.msra.mxu0 %v47
    %137 = vmatmul.f32.gmra.mxu0 %v119
    %v138 = vpop.f32.mrf.mxu0
    %v139 = vadd.f32 0.0, %v138
    %140 = vdwg.mxu0
    %141 = vmatpush.msra.mxu0 %v78
    %142 = vmatpush.msra.mxu0 %v76
    %143 = vmatpush.msra.mxu0 %v74
    %144 = vmatpush.msra.mxu0 %v72
    %145 = vmatpush.msra.mxu0 %v70
    %146 = vmatpush.msra.mxu0 %v68
    %147 = vmatpush.msra.mxu0 %v66
    %148 = vmatpush.msra.mxu0 %v64
    %149 = vmatpush.msra.mxu0 %v62
    %150 = vmatpush.msra.mxu0 %v60
    %151 = vmatpush.msra.mxu0 %v58
    %152 = vmatpush.msra.mxu0 %v56
    %153 = vmatpush.msra.mxu0 %v54
    %154 = vmatpush.msra.mxu0 %v52
    %155 = vmatpush.msra.mxu0 %v50
    %156 = vmatpush.msra.mxu0 %v48
    %157 = vmatmul.f32.gmra.mxu0 %v119
    %v158 = vpop.f32.mrf.mxu0
    %v159 = vadd.f32 0.0, %v158
    %160 = vdwg.mxu0
    %161 = vst [vmem:[#allocation7] sm:$0xff] %v139
    %162 = vst [vmem:[#allocation7 + $0x8] sm:$0xff] %v159
    // Predicated region
    $region18: #{tied_autoencoder_forward.1} parent=1 // pred_check
      _
    $region19: #{tied_autoencoder_forward.1} parent=1 // pred_check_branch
      %164 = sbr.rel (0) target = $region21
    $region20: #{tied_autoencoder_forward.1} parent=1 // pred_region
      %166 = vsyncadd [#allocation4], 0
      %s168 = sshll.u32 [#allocation7], 4
      %s169 = int_to_ptr.vmem [resolvable:$true] %s168
      %s170 = sshll.u32 %s2, 4
      %s171 = int_to_ptr.hbm [resolvable:$true] %s170
      %173 = dma.vmem_to_hbm [thread:$0]  %s169, 256, %s171, [#allocation4]
    $region21: #{tied_autoencoder_forward.1} parent=1 // pred_fallthru
      _
    // Predicated region
    $region22: #{tied_autoencoder_forward.1} parent=1 // pred_check
      _
    $region23: #{tied_autoencoder_forward.1} parent=1 // pred_check_branch
      %175 = sbr.rel (0) target = $region25
    $region24: #{tied_autoencoder_forward.1} parent=1 // pred_region
      %177 = vsyncadd [#allocation9], 0
      %s179 = sshll.u32 [#allocation8], 4
      %s180 = int_to_ptr.vmem [resolvable:$true] %s179
      %s181 = sshll.u32 %s3, 4
      %s182 = int_to_ptr.hbm [resolvable:$true] %s181
      %184 = dma.vmem_to_hbm [thread:$0]  %s180, 128, %s182, [#allocation9]
    $region25: #{tied_autoencoder_forward.1} parent=1 // pred_fallthru
      _
    // Predicated region
    $region26: #{tied_autoencoder_forward.1} parent=1 // pred_check
      _
    $region27: #{tied_autoencoder_forward.1} parent=1 // pred_check_branch
      %186 = sbr.rel (0) target = $region29
    $region28: #{tied_autoencoder_forward.1} parent=1 // pred_region
      %188 = dma.done [#allocation4], 256
    $region29: #{tied_autoencoder_forward.1} parent=1 // pred_fallthru
      _
    // Predicated region
    $region30: #{tied_autoencoder_forward.1} parent=1 // pred_check
      _
    $region31: #{tied_autoencoder_forward.1} parent=1 // pred_check_branch
      %190 = sbr.rel (0) target = $region33
    $region32: #{tied_autoencoder_forward.1} parent=1 // pred_region
      %192 = dma.done [#allocation9], 128
    $region33: #{tied_autoencoder_forward.1} parent=1 // pred_fallthru
      _
    %193 = vsyncpa [#allocation3], 1
    %194 = vsyncpa [#allocation6], 1
    %195 = vsyncpa [#allocation4], 1
    %196 = vsyncpa [#allocation9], 1

</llo_original>
